<compile_context>
chip_gen: v7x
topology: tpu7x:2x2x1
jax: 0.10.0
libtpu: 0.0.40
codegen_flags: <defaults>
</compile_context>

<pallas_src>
import math
import functools

import jax
import jax.numpy as jnp
from jax.experimental import pallas as pl
from jax.experimental.pallas import tpu as pltpu


def _round_up(x, m):
    return ((x + m - 1) // m) * m


def _bpr_kernel(*refs, exp_weighted: bool, tile_i: int):
    if exp_weighted:
        x_col, t_col, w_col, x_row, t_row, w_row, out_ref = refs
    else:
        x_col, t_col, x_row, t_row = refs[:4]
        out_ref = refs[4]
        w_col = w_row = None

    j = pl.program_id(1)

    @pl.when(j == 0)
    def _():
        out_ref[...] = jnp.zeros_like(out_ref)

    x_i = x_col[...]            # (tile_i, 1)   input[i]
    t_i = t_col[...]            # (tile_i, 1)   target[i]
    x_j = x_row[...]            # (1, tile_j)   input[j]
    t_j = t_row[...]            # (1, tile_j)   target[j]

    # O(tile_i + tile_j) transcendentals; the O(tile_i * tile_j) inner work
    # below only needs one log per pairwise element.
    e_i = jnp.exp(x_i)          # (tile_i, 1)
    e_nj = jnp.exp(-x_j)        # (1, tile_j)

    p = e_i * e_nj              # (tile_i, tile_j) == exp(input[i] - input[j])
    diff = x_i - x_j            # fallback when p overflows / is inf*0 == NaN
    # softplus(input[i] - input[j]) == log(1 + exp(-(input[j] - input[i])))
    loss = jnp.where(p < 1e30, jnp.log(1.0 + p), diff)

    if exp_weighted:
        # (exp(target[i]) - 1) * (exp(target[j]) - 1), precomputed in wrapper
        loss = (w_col[...] * w_row[...]) * loss

    # pair (i, j) counts iff target[j] > target[i]; NaN-padded targets -> False
    mask = t_j > t_i
    loss = jnp.where(mask, loss, 0.0)

    # Fold (tile_i, tile_j) -> (8, tile_j) with aligned sublane-slab adds
    # (pure VPU vreg adds, no in-kernel cross-lane reduction).
    part = loss[0:8, :]
    for k in range(1, tile_i // 8):
        part = part + loss[k * 8:(k + 1) * 8, :]
    out_ref[...] += part


def bpr_loss(input_, target, exp_weighted: bool = False,
             tile_i: int = 256, tile_j: int = 1024):
    """Pallas implementation of BPRLoss.forward(input, target)."""
    N = input_.shape[0]
    x = input_.astype(jnp.float32)
    t = target.astype(jnp.float32)

    # Lane-aligned padding; large problems are padded to a multiple of tile_j
    # so the grid tiles evenly.
    Np = _round_up(N, 128)
    if Np >= tile_j:
        Np = _round_up(Np, tile_j)
        tj = tile_j
    else:
        tj = Np
    ti = tile_i if Np % tile_i == 0 else 128

    pad = Np - N
    # input padded with zeros (harmless, masked out); target padded with NaN so
    # every comparison against a padded index is False.
    x_row = jnp.pad(x, (0, pad)).reshape(1, Np)
    t_row = jnp.pad(t, (0, pad), constant_values=jnp.nan).reshape(1, Np)
    # Column layouts built in the wrapper (layout plumbing, not in-kernel XLU).
    x_col = x_row.reshape(Np, 1)
    t_col = t_row.reshape(Np, 1)

    num_i = Np // ti
    num_j = Np // tj
    grid = (num_i, num_j)

    col_spec = pl.BlockSpec((ti, 1), lambda i, j: (i, 0))
    row_spec = pl.BlockSpec((1, tj), lambda i, j: (0, j))
    out_spec = pl.BlockSpec((8, tj), lambda i, j: (i, 0))

    if exp_weighted:
        w_row = jnp.exp(t_row) - 1.0          # NaN on padded lanes; masked in kernel
        w_col = w_row.reshape(Np, 1)
        args = (x_col, t_col, w_col, x_row, t_row, w_row)
        in_specs = [col_spec, col_spec, col_spec, row_spec, row_spec, row_spec]
    else:
        args = (x_col, t_col, x_row, t_row)
        in_specs = [col_spec, col_spec, row_spec, row_spec]

    kernel = functools.partial(_bpr_kernel, exp_weighted=exp_weighted, tile_i=ti)

    cost = pl.CostEstimate(
        flops=int(8 * Np * Np),
        transcendentals=int(Np * Np + 2 * Np),
        bytes_accessed=int(4 * (6 * Np + 8 * num_i * tj)),
    )

    partials = pl.pallas_call(
        kernel,
        grid=grid,
        in_specs=in_specs,
        out_specs=out_spec,
        out_shape=jax.ShapeDtypeStruct((8 * num_i, tj), jnp.float32),
        compiler_params=pltpu.CompilerParams(
            dimension_semantics=("parallel", "arbitrary")),
        cost_estimate=cost,
    )(*args)

    total = jnp.sum(partials)   # final cross-lane reduction in plain JAX
    if exp_weighted:
        scale = 2.0 / (N * (math.e - 1.0)) ** 2
    else:
        scale = 2.0 / N ** 2
    return scale * total


def _bpr_loss_ref(input_, target, exp_weighted: bool = False):
    """Pure-JAX reference mirroring the PyTorch loop semantics."""
    N = input_.shape[0]
    x = input_.astype(jnp.float32)
    t = target.astype(jnp.float32)
    diff = x[:, None] - x[None, :]                  # input[i] - input[j]
    mask = t[None, :] > t[:, None]                  # target[j] > target[i]
    loss = jnp.log(1.0 + jnp.exp(diff))
    if exp_weighted:
        w = (jnp.exp(t)[:, None] - 1.0) * (jnp.exp(t)[None, :] - 1.0)
        loss = w * loss
        scale = 2.0 / (N * (math.e - 1.0)) ** 2
    else:
        scale = 2.0 / N ** 2
    return scale * jnp.sum(jnp.where(mask, loss, 0.0))


if __name__ == "__main__":
    key = jax.random.PRNGKey(0)
    # N=200 -> single tile; N=330 -> multiple i-blocks (ti=128) + padding;
    # N=1500 -> Np=2048, grid=(8,2): exercises the j-axis accumulation.
    for N in (200, 330, 1500):
        key, k1, k2 = jax.random.split(key, 3)
        input_ = jax.random.normal(k1, (N,), dtype=jnp.float32)
        target = jax.random.uniform(k2, (N,), dtype=jnp.float32)
        for expw in (False, True):
            out = jax.block_until_ready(bpr_loss(input_, target, exp_weighted=expw))
            ref = jax.block_until_ready(_bpr_loss_ref(input_, target, exp_weighted=expw))
            assert jnp.allclose(out, ref, rtol=2e-4, atol=1e-6), (N, expw, out, ref)
    print("KERNEL_OK")
</pallas_src>

<mosaic_0001>
module attributes {stable_mosaic.version = 11 : i64} {
  func.func @_bpr_kernel(%arg0: i32, %arg1: i32, %arg2: memref<256x1xf32, #tpu.memory_space<vmem>>, %arg3: memref<256x1xf32, #tpu.memory_space<vmem>>, %arg4: memref<1x256xf32, #tpu.memory_space<vmem>>, %arg5: memref<1x256xf32, #tpu.memory_space<vmem>>, %arg6: memref<8x256xf32, #tpu.memory_space<vmem>>) attributes {dimension_semantics = [#tpu.dimension_semantics<parallel>, #tpu.dimension_semantics<arbitrary>], iteration_bounds = array<i64: 1, 1>, scalar_prefetch = 0 : i64, scratch_operands = 0 : i64, tpu.core_type = #tpu.core_type<tc>, window_params = [{transform_indices = @transform_0, window_bounds = array<i64: 256, 1>}, {transform_indices = @transform_1, window_bounds = array<i64: 256, 1>}, {transform_indices = @transform_2, window_bounds = array<i64: 1, 256>}, {transform_indices = @transform_3, window_bounds = array<i64: 1, 256>}, {transform_indices = @transform_4, window_bounds = array<i64: 8, 256>}]} {
    %c0_i32 = arith.constant 0 : i32
    %0 = arith.cmpi eq, %arg1, %c0_i32 : i32
    %1 = arith.extui %0 : i1 to i32
    %c0_i32_0 = arith.constant 0 : i32
    %2 = arith.cmpi ne, %1, %c0_i32_0 : i32
    scf.if %2 {
      %cst_15 = arith.constant 0.000000e+00 : f32
      %94 = vector.broadcast %cst_15 : f32 to vector<8x256xf32>
      %c0_16 = arith.constant 0 : index
      %c0_17 = arith.constant 0 : index
      %95 = vector.load %arg6[%c0_16, %c0_17] : memref<8x256xf32, #tpu.memory_space<vmem>>, vector<8x256xf32>
      tpu.vector_store %arg6[%c0_16, %c0_17], %94 {strides = array<i32>} : memref<8x256xf32, #tpu.memory_space<vmem>>, vector<8x256xf32>,
    } else {
    }
    %c0 = arith.constant 0 : index
    %c0_1 = arith.constant 0 : index
    %3 = vector.load %arg2[%c0, %c0_1] : memref<256x1xf32, #tpu.memory_space<vmem>>, vector<256x1xf32>
    %c0_2 = arith.constant 0 : index
    %c0_3 = arith.constant 0 : index
    %4 = vector.load %arg3[%c0_2, %c0_3] : memref<256x1xf32, #tpu.memory_space<vmem>>, vector<256x1xf32>
    %c0_4 = arith.constant 0 : index
    %c0_5 = arith.constant 0 : index
    %5 = vector.load %arg4[%c0_4, %c0_5] : memref<1x256xf32, #tpu.memory_space<vmem>>, vector<1x256xf32>
    %c0_6 = arith.constant 0 : index
    %c0_7 = arith.constant 0 : index
    %6 = vector.load %arg5[%c0_6, %c0_7] : memref<1x256xf32, #tpu.memory_space<vmem>>, vector<1x256xf32>
    %7 = math.exp %3 : vector<256x1xf32>
    %cst = arith.constant 0.000000e+00 : f32
    %8 = vector.broadcast %cst : f32 to vector<1x256xf32>
    %9 = arith.subf %8, %5 : vector<1x256xf32>
    %10 = math.exp %9 : vector<1x256xf32>
    %11 = vector.broadcast %7 : vector<256x1xf32> to vector<256x256xf32>
    %12 = vector.broadcast %10 : vector<1x256xf32> to vector<256x256xf32>
    %13 = arith.mulf %11, %12 : vector<256x256xf32>
    %14 = vector.broadcast %3 : vector<256x1xf32> to vector<256x256xf32>
    %15 = vector.broadcast %5 : vector<1x256xf32> to vector<256x256xf32>
    %16 = arith.subf %14, %15 : vector<256x256xf32>
    %cst_8 = arith.constant 1.000000e+30 : f32
    %17 = vector.broadcast %cst_8 : f32 to vector<256x256xf32>
    %18 = arith.cmpf olt, %13, %17 : vector<256x256xf32>
    %cst_9 = arith.constant 1.000000e+00 : f32
    %19 = vector.broadcast %cst_9 : f32 to vector<256x256xf32>
    %20 = arith.addf %19, %13 : vector<256x256xf32>
    %21 = math.log %20 : vector<256x256xf32>
    %22 = arith.select %18, %21, %16 : vector<256x256xi1>, vector<256x256xf32>
    %23 = vector.broadcast %6 : vector<1x256xf32> to vector<256x256xf32>
    %24 = vector.broadcast %4 : vector<256x1xf32> to vector<256x256xf32>
    %25 = arith.cmpf ogt, %23, %24 : vector<256x256xf32>
    %cst_10 = arith.constant 0.000000e+00 : f32
    %26 = vector.broadcast %cst_10 : f32 to vector<256x256xf32>
    %27 = arith.select %25, %22, %26 : vector<256x256xi1>, vector<256x256xf32>
    %28 = vector.extract_strided_slice %27 {offsets = [0, 0], sizes = [8, 256], strides = [1, 1]} : vector<256x256xf32> to vector<8x256xf32>
    %29 = vector.extract_strided_slice %27 {offsets = [8, 0], sizes = [8, 256], strides = [1, 1]} : vector<256x256xf32> to vector<8x256xf32>
    %30 = arith.addf %28, %29 : vector<8x256xf32>
    %31 = vector.extract_strided_slice %27 {offsets = [16, 0], sizes = [8, 256], strides = [1, 1]} : vector<256x256xf32> to vector<8x256xf32>
    %32 = arith.addf %30, %31 : vector<8x256xf32>
    %33 = vector.extract_strided_slice %27 {offsets = [24, 0], sizes = [8, 256], strides = [1, 1]} : vector<256x256xf32> to vector<8x256xf32>
    %34 = arith.addf %32, %33 : vector<8x256xf32>
    %35 = vector.extract_strided_slice %27 {offsets = [32, 0], sizes = [8, 256], strides = [1, 1]} : vector<256x256xf32> to vector<8x256xf32>
    %36 = arith.addf %34, %35 : vector<8x256xf32>
    %37 = vector.extract_strided_slice %27 {offsets = [40, 0], sizes = [8, 256], strides = [1, 1]} : vector<256x256xf32> to vector<8x256xf32>
    %38 = arith.addf %36, %37 : vector<8x256xf32>
    %39 = vector.extract_strided_slice %27 {offsets = [48, 0], sizes = [8, 256], strides = [1, 1]} : vector<256x256xf32> to vector<8x256xf32>
    %40 = arith.addf %38, %39 : vector<8x256xf32>
    %41 = vector.extract_strided_slice %27 {offsets = [56, 0], sizes = [8, 256], strides = [1, 1]} : vector<256x256xf32> to vector<8x256xf32>
    %42 = arith.addf %40, %41 : vector<8x256xf32>
    %43 = vector.extract_strided_slice %27 {offsets = [64, 0], sizes = [8, 256], strides = [1, 1]} : vector<256x256xf32> to vector<8x256xf32>
    %44 = arith.addf %42, %43 : vector<8x256xf32>
    %45 = vector.extract_strided_slice %27 {offsets = [72, 0], sizes = [8, 256], strides = [1, 1]} : vector<256x256xf32> to vector<8x256xf32>
    %46 = arith.addf %44, %45 : vector<8x256xf32>
    %47 = vector.extract_strided_slice %27 {offsets = [80, 0], sizes = [8, 256], strides = [1, 1]} : vector<256x256xf32> to vector<8x256xf32>
    %48 = arith.addf %46, %47 : vector<8x256xf32>
    %49 = vector.extract_strided_slice %27 {offsets = [88, 0], sizes = [8, 256], strides = [1, 1]} : vector<256x256xf32> to vector<8x256xf32>
    %50 = arith.addf %48, %49 : vector<8x256xf32>
    %51 = vector.extract_strided_slice %27 {offsets = [96, 0], sizes = [8, 256], strides = [1, 1]} : vector<256x256xf32> to vector<8x256xf32>
    %52 = arith.addf %50, %51 : vector<8x256xf32>
    %53 = vector.extract_strided_slice %27 {offsets = [104, 0], sizes = [8, 256], strides = [1, 1]} : vector<256x256xf32> to vector<8x256xf32>
    %54 = arith.addf %52, %53 : vector<8x256xf32>
    %55 = vector.extract_strided_slice %27 {offsets = [112, 0], sizes = [8, 256], strides = [1, 1]} : vector<256x256xf32> to vector<8x256xf32>
    %56 = arith.addf %54, %55 : vector<8x256xf32>
    %57 = vector.extract_strided_slice %27 {offsets = [120, 0], sizes = [8, 256], strides = [1, 1]} : vector<256x256xf32> to vector<8x256xf32>
    %58 = arith.addf %56, %57 : vector<8x256xf32>
    %59 = vector.extract_strided_slice %27 {offsets = [128, 0], sizes = [8, 256], strides = [1, 1]} : vector<256x256xf32> to vector<8x256xf32>
    %60 = arith.addf %58, %59 : vector<8x256xf32>
    %61 = vector.extract_strided_slice %27 {offsets = [136, 0], sizes = [8, 256], strides = [1, 1]} : vector<256x256xf32> to vector<8x256xf32>
    %62 = arith.addf %60, %61 : vector<8x256xf32>
    %63 = vector.extract_strided_slice %27 {offsets = [144, 0], sizes = [8, 256], strides = [1, 1]} : vector<256x256xf32> to vector<8x256xf32>
    %64 = arith.addf %62, %63 : vector<8x256xf32>
    %65 = vector.extract_strided_slice %27 {offsets = [152, 0], sizes = [8, 256], strides = [1, 1]} : vector<256x256xf32> to vector<8x256xf32>
    %66 = arith.addf %64, %65 : vector<8x256xf32>
    %67 = vector.extract_strided_slice %27 {offsets = [160, 0], sizes = [8, 256], strides = [1, 1]} : vector<256x256xf32> to vector<8x256xf32>
    %68 = arith.addf %66, %67 : vector<8x256xf32>
    %69 = vector.extract_strided_slice %27 {offsets = [168, 0], sizes = [8, 256], strides = [1, 1]} : vector<256x256xf32> to vector<8x256xf32>
    %70 = arith.addf %68, %69 : vector<8x256xf32>
    %71 = vector.extract_strided_slice %27 {offsets = [176, 0], sizes = [8, 256], strides = [1, 1]} : vector<256x256xf32> to vector<8x256xf32>
    %72 = arith.addf %70, %71 : vector<8x256xf32>
    %73 = vector.extract_strided_slice %27 {offsets = [184, 0], sizes = [8, 256], strides = [1, 1]} : vector<256x256xf32> to vector<8x256xf32>
    %74 = arith.addf %72, %73 : vector<8x256xf32>
    %75 = vector.extract_strided_slice %27 {offsets = [192, 0], sizes = [8, 256], strides = [1, 1]} : vector<256x256xf32> to vector<8x256xf32>
    %76 = arith.addf %74, %75 : vector<8x256xf32>
    %77 = vector.extract_strided_slice %27 {offsets = [200, 0], sizes = [8, 256], strides = [1, 1]} : vector<256x256xf32> to vector<8x256xf32>
    %78 = arith.addf %76, %77 : vector<8x256xf32>
    %79 = vector.extract_strided_slice %27 {offsets = [208, 0], sizes = [8, 256], strides = [1, 1]} : vector<256x256xf32> to vector<8x256xf32>
    %80 = arith.addf %78, %79 : vector<8x256xf32>
    %81 = vector.extract_strided_slice %27 {offsets = [216, 0], sizes = [8, 256], strides = [1, 1]} : vector<256x256xf32> to vector<8x256xf32>
    %82 = arith.addf %80, %81 : vector<8x256xf32>
    %83 = vector.extract_strided_slice %27 {offsets = [224, 0], sizes = [8, 256], strides = [1, 1]} : vector<256x256xf32> to vector<8x256xf32>
    %84 = arith.addf %82, %83 : vector<8x256xf32>
    %85 = vector.extract_strided_slice %27 {offsets = [232, 0], sizes = [8, 256], strides = [1, 1]} : vector<256x256xf32> to vector<8x256xf32>
    %86 = arith.addf %84, %85 : vector<8x256xf32>
    %87 = vector.extract_strided_slice %27 {offsets = [240, 0], sizes = [8, 256], strides = [1, 1]} : vector<256x256xf32> to vector<8x256xf32>
    %88 = arith.addf %86, %87 : vector<8x256xf32>
    %89 = vector.extract_strided_slice %27 {offsets = [248, 0], sizes = [8, 256], strides = [1, 1]} : vector<256x256xf32> to vector<8x256xf32>
    %90 = arith.addf %88, %89 : vector<8x256xf32>
    %c0_11 = arith.constant 0 : index
    %c0_12 = arith.constant 0 : index
    %91 = vector.load %arg6[%c0_11, %c0_12] : memref<8x256xf32, #tpu.memory_space<vmem>>, vector<8x256xf32>
    %92 = arith.addf %91, %90 : vector<8x256xf32>
    %c0_13 = arith.constant 0 : index
    %c0_14 = arith.constant 0 : index
    %93 = vector.load %arg6[%c0_13, %c0_14] : memref<8x256xf32, #tpu.memory_space<vmem>>, vector<8x256xf32>
    tpu.vector_store %arg6[%c0_13, %c0_14], %92 {strides = array<i32>} : memref<8x256xf32, #tpu.memory_space<vmem>>, vector<8x256xf32>,
    return
  }
  func.func @transform_0(%arg0: i32, %arg1: i32) -> (i32, i32) {
    %c0_i32 = arith.constant 0 : i32
    %c0_i32_0 = arith.constant 0 : i32
    return %arg0, %c0_i32 : i32, i32
  }
  func.func @transform_1(%arg0: i32, %arg1: i32) -> (i32, i32) {
    %c0_i32 = arith.constant 0 : i32
    %c0_i32_0 = arith.constant 0 : i32
    return %arg0, %c0_i32 : i32, i32
  }
  func.func @transform_2(%arg0: i32, %arg1: i32) -> (i32, i32) {
    %c0_i32 = arith.constant 0 : i32
    %c0_i32_0 = arith.constant 0 : i32
    return %c0_i32, %arg1 : i32, i32
  }
  func.func @transform_3(%arg0: i32, %arg1: i32) -> (i32, i32) {
    %c0_i32 = arith.constant 0 : i32
    %c0_i32_0 = arith.constant 0 : i32
    return %c0_i32, %arg1 : i32, i32
  }
  func.func @transform_4(%arg0: i32, %arg1: i32) -> (i32, i32) {
    %c0_i32 = arith.constant 0 : i32
    %c0_i32_0 = arith.constant 0 : i32
    return %arg0, %c0_i32 : i32, i32
  }
}

</mosaic_0001>

<llo_original>
// kernel: tpu_custom_call.1
$region0: #{tpu_custom_call.1}
  #allocation0 [shape = 'u32[]', space=smem, size = 0x4, offset = 0x4, fixed_abs, tag = 'smem constant byte address 0x4 - core index']
  #allocation1 [shape = 'u32[144,128]{1,0:T(1,128)}', space=vmem, size = 0x12000, scoped, tag = 'internal scratch']
  %s0 = inlined_call_operand.vmem [shape: f32[256,1], index: 0, kind: input, shape index: {}]
  %s1 = inlined_call_operand.vmem [shape: f32[256,1], index: 1, kind: input, shape index: {}]
  %s2 = inlined_call_operand.vmem [shape: f32[1,256], index: 2, kind: input, shape index: {}]
  %s3 = inlined_call_operand.vmem [shape: f32[1,256], index: 3, kind: input, shape index: {}]
  %s4 = inlined_call_operand.hbm [shape: f32[8,256], index: 4, kind: output, shape index: {}]
  %s5 = sld [smem:[#allocation0]]
  $region30: #{tpu_custom_call.1} parent=0
    _
  %s7 = ssub.s32 1, %s5
  %s8 = scalar_select 0, %s7, %s5
  $region1: #{tpu_custom_call.1} parent=0
    #allocation2 [shape = 'u8[8192]{0}', space=vmem, size = 0x2000, scoped, tag = 'output window, operand 0, single buffered']
    #allocation3 [shape = 's32[1]{0}', space=sflag, size = 0x4, scoped, tag = 'scoped memory for tpu_custom_call.1']
    %9 = vsyncpa [#allocation3], 0
    // Predicated region
    $region2: #{tpu_custom_call.1} parent=1 // pred_check
      _
    $region3: #{tpu_custom_call.1} parent=1 // pred_check_branch
      %11 = sbr.rel (0) target = $region5
    $region4: #{tpu_custom_call.1} parent=1 // pred_region
      _
    $region5: #{tpu_custom_call.1} parent=1 // pred_fallthru
      _
    // Predicated region
    $region6: #{tpu_custom_call.1} parent=1 // pred_check
      _
    $region7: #{tpu_custom_call.1} parent=1 // pred_check_branch
      %13 = sbr.rel (0) target = $region9
    $region8: #{tpu_custom_call.1} parent=1 // pred_region
      _
    $region9: #{tpu_custom_call.1} parent=1 // pred_fallthru
      _
    // Predicated region
    $region10: #{tpu_custom_call.1} parent=1 // pred_check
      _
    $region11: #{tpu_custom_call.1} parent=1 // pred_check_branch
      %15 = sbr.rel (0) target = $region13
    $region12: #{tpu_custom_call.1} parent=1 // pred_region
      _
    $region13: #{tpu_custom_call.1} parent=1 // pred_fallthru
      _
    // Predicated region
    $region14: #{tpu_custom_call.1} parent=1 // pred_check
      _
    $region15: #{tpu_custom_call.1} parent=1 // pred_check_branch
      %17 = sbr.rel (0) target = $region17
    $region16: #{tpu_custom_call.1} parent=1 // pred_region
      _
    $region17: #{tpu_custom_call.1} parent=1 // pred_fallthru
      _
    %p18 = scmp.eq.s32.totalorder 0, 0
    // Predicated region
    $region18: #{tpu_custom_call.1} parent=1 // pred_check
      %p19 = pneg %p18
    $region19: #{tpu_custom_call.1} parent=1 // pred_check_branch
      %21 = sbr.rel (%p19) target = $region21
    $region20: #{tpu_custom_call.1} parent=1 // pred_region
      %22 = vst [vmem:[#allocation2] sm:$0xff] 0.0
      %23 = vst [vmem:[#allocation2 + $0x8] sm:$0xff] 0.0
    $region21: #{tpu_custom_call.1} parent=1 // pred_fallthru
      _
    %v24 = vld [vmem:[%s0] sm:$0xff]
    %v25 = vld [vmem:[%s0 + $0x8] sm:$0xff]
    %v26 = vld [vmem:[%s0 + $0x10] sm:$0xff]
    %v27 = vld [vmem:[%s0 + $0x18] sm:$0xff]
    %v28 = vld [vmem:[%s0 + $0x20] sm:$0xff]
    %v29 = vld [vmem:[%s0 + $0x28] sm:$0xff]
    %v30 = vld [vmem:[%s0 + $0x30] sm:$0xff]
    %v31 = vld [vmem:[%s0 + $0x38] sm:$0xff]
    %v32 = vld [vmem:[%s0 + $0x40] sm:$0xff]
    %v33 = vld [vmem:[%s0 + $0x48] sm:$0xff]
    %v34 = vld [vmem:[%s0 + $0x50] sm:$0xff]
    %v35 = vld [vmem:[%s0 + $0x58] sm:$0xff]
    %v36 = vld [vmem:[%s0 + $0x60] sm:$0xff]
    %v37 = vld [vmem:[%s0 + $0x68] sm:$0xff]
    %v38 = vld [vmem:[%s0 + $0x70] sm:$0xff]
    %v39 = vld [vmem:[%s0 + $0x78] sm:$0xff]
    %v40 = vld [vmem:[%s0 + $0x80] sm:$0xff]
    %v41 = vld [vmem:[%s0 + $0x88] sm:$0xff]
    %v42 = vld [vmem:[%s0 + $0x90] sm:$0xff]
    %v43 = vld [vmem:[%s0 + $0x98] sm:$0xff]
    %v44 = vld [vmem:[%s0 + $0xa0] sm:$0xff]
    %v45 = vld [vmem:[%s0 + $0xa8] sm:$0xff]
    %v46 = vld [vmem:[%s0 + $0xb0] sm:$0xff]
    %v47 = vld [vmem:[%s0 + $0xb8] sm:$0xff]
    %v48 = vld [vmem:[%s0 + $0xc0] sm:$0xff]
    %v49 = vld [vmem:[%s0 + $0xc8] sm:$0xff]
    %v50 = vld [vmem:[%s0 + $0xd0] sm:$0xff]
    %v51 = vld [vmem:[%s0 + $0xd8] sm:$0xff]
    %v52 = vld [vmem:[%s0 + $0xe0] sm:$0xff]
    %v53 = vld [vmem:[%s0 + $0xe8] sm:$0xff]
    %v54 = vld [vmem:[%s0 + $0xf0] sm:$0xff]
    %v55 = vld [vmem:[%s0 + $0xf8] sm:$0xff]
    %v56 = vld [vmem:[%s1] sm:$0xff]
    %v57 = vld [vmem:[%s1 + $0x8] sm:$0xff]
    %v58 = vld [vmem:[%s1 + $0x10] sm:$0xff]
    %v59 = vld [vmem:[%s1 + $0x18] sm:$0xff]
    %v60 = vld [vmem:[%s1 + $0x20] sm:$0xff]
    %v61 = vld [vmem:[%s1 + $0x28] sm:$0xff]
    %v62 = vld [vmem:[%s1 + $0x30] sm:$0xff]
    %v63 = vld [vmem:[%s1 + $0x38] sm:$0xff]
    %v64 = vld [vmem:[%s1 + $0x40] sm:$0xff]
    %v65 = vld [vmem:[%s1 + $0x48] sm:$0xff]
    %v66 = vld [vmem:[%s1 + $0x50] sm:$0xff]
    %v67 = vld [vmem:[%s1 + $0x58] sm:$0xff]
    %v68 = vld [vmem:[%s1 + $0x60] sm:$0xff]
    %v69 = vld [vmem:[%s1 + $0x68] sm:$0xff]
    %v70 = vld [vmem:[%s1 + $0x70] sm:$0xff]
    %v71 = vld [vmem:[%s1 + $0x78] sm:$0xff]
    %v72 = vld [vmem:[%s1 + $0x80] sm:$0xff]
    %v73 = vld [vmem:[%s1 + $0x88] sm:$0xff]
    %v74 = vld [vmem:[%s1 + $0x90] sm:$0xff]
    %v75 = vld [vmem:[%s1 + $0x98] sm:$0xff]
    %v76 = vld [vmem:[%s1 + $0xa0] sm:$0xff]
    %v77 = vld [vmem:[%s1 + $0xa8] sm:$0xff]
    %v78 = vld [vmem:[%s1 + $0xb0] sm:$0xff]
    %v79 = vld [vmem:[%s1 + $0xb8] sm:$0xff]
    %v80 = vld [vmem:[%s1 + $0xc0] sm:$0xff]
    %v81 = vld [vmem:[%s1 + $0xc8] sm:$0xff]
    %v82 = vld [vmem:[%s1 + $0xd0] sm:$0xff]
    %v83 = vld [vmem:[%s1 + $0xd8] sm:$0xff]
    %v84 = vld [vmem:[%s1 + $0xe0] sm:$0xff]
    %v85 = vld [vmem:[%s1 + $0xe8] sm:$0xff]
    %v86 = vld [vmem:[%s1 + $0xf0] sm:$0xff]
    %v87 = vld [vmem:[%s1 + $0xf8] sm:$0xff]
    %v88 = vld [vmem:[%s2] sm:$0x3]
    %v89 = vld [vmem:[%s3] sm:$0x3]
    %v90 = vmul.f32 %v24, 1.442695
    %v91 = vpow.pop %v90
    %v92 = vmul.f32 %v25, 1.442695
    %v93 = vpow.pop %v92
    %v94 = vmul.f32 %v26, 1.442695
    %v95 = vpow.pop %v94
    %v96 = vmul.f32 %v27, 1.442695
    %v97 = vpow.pop %v96
    %v98 = vmul.f32 %v28, 1.442695
    %v99 = vpow.pop %v98
    %v100 = vmul.f32 %v29, 1.442695
    %v101 = vpow.pop %v100
    %v102 = vmul.f32 %v30, 1.442695
    %v103 = vpow.pop %v102
    %v104 = vmul.f32 %v31, 1.442695
    %v105 = vpow.pop %v104
    %v106 = vmul.f32 %v32, 1.442695
    %v107 = vpow.pop %v106
    %v108 = vmul.f32 %v33, 1.442695
    %v109 = vpow.pop %v108
    %v110 = vmul.f32 %v34, 1.442695
    %v111 = vpow.pop %v110
    %v112 = vmul.f32 %v35, 1.442695
    %v113 = vpow.pop %v112
    %v114 = vmul.f32 %v36, 1.442695
    %v115 = vpow.pop %v114
    %v116 = vmul.f32 %v37, 1.442695
    %v117 = vpow.pop %v116
    %v118 = vmul.f32 %v38, 1.442695
    %v119 = vpow.pop %v118
    %v120 = vmul.f32 %v39, 1.442695
    %v121 = vpow.pop %v120
    %v122 = vmul.f32 %v40, 1.442695
    %v123 = vpow.pop %v122
    %v124 = vmul.f32 %v41, 1.442695
    %v125 = vpow.pop %v124
    %v126 = vmul.f32 %v42, 1.442695
    %v127 = vpow.pop %v126
    %v128 = vmul.f32 %v43, 1.442695
    %v129 = vpow.pop %v128
    %v130 = vmul.f32 %v44, 1.442695
    %v131 = vpow.pop %v130
    %v132 = vmul.f32 %v45, 1.442695
    %v133 = vpow.pop %v132
    %v134 = vmul.f32 %v46, 1.442695
    %v135 = vpow.pop %v134
    %v136 = vmul.f32 %v47, 1.442695
    %v137 = vpow.pop %v136
    %v138 = vmul.f32 %v48, 1.442695
    %v139 = vpow.pop %v138
    %v140 = vmul.f32 %v49, 1.442695
    %v141 = vpow.pop %v140
    %v142 = vmul.f32 %v50, 1.442695
    %v143 = vpow.pop %v142
    %v144 = vmul.f32 %v51, 1.442695
    %v145 = vpow.pop %v144
    %v146 = vmul.f32 %v52, 1.442695
    %v147 = vpow.pop %v146
    %v148 = vmul.f32 %v53, 1.442695
    %v149 = vpow.pop %v148
    %v150 = vmul.f32 %v54, 1.442695
    %v151 = vpow.pop %v150
    %v152 = vmul.f32 %v55, 1.442695
    %v153 = vpow.pop %v152
    %v154 = vsub.f32 0.0, %v88
    %v155 = vmul.f32 %v154, 1.442695
    %v156 = vpow.pop %v155
    %158 = vset.pattern.permute.xlu0 0
    %159 = vperm.xlu0 %158, %v91
    %v160 = vpop.permute.xlu0 %159
    %163 = vset.pattern.permute.xlu0 0
    %164 = vperm.xlu0 %163, %v93
    %v165 = vpop.permute.xlu0 %164
    %168 = vset.pattern.permute.xlu0 0
    %169 = vperm.xlu0 %168, %v95
    %v170 = vpop.permute.xlu0 %169
    %173 = vset.pattern.permute.xlu0 0
    %174 = vperm.xlu0 %173, %v97
    %v175 = vpop.permute.xlu0 %174
    %178 = vset.pattern.permute.xlu0 0
    %179 = vperm.xlu0 %178, %v99
    %v180 = vpop.permute.xlu0 %179
    %183 = vset.pattern.permute.xlu0 0
    %184 = vperm.xlu0 %183, %v101
    %v185 = vpop.permute.xlu0 %184
    %188 = vset.pattern.permute.xlu0 0
    %189 = vperm.xlu0 %188, %v103
    %v190 = vpop.permute.xlu0 %189
    %193 = vset.pattern.permute.xlu0 0
    %194 = vperm.xlu0 %193, %v105
    %v195 = vpop.permute.xlu0 %194
    %198 = vset.pattern.permute.xlu0 0
    %199 = vperm.xlu0 %198, %v107
    %v200 = vpop.permute.xlu0 %199
    %203 = vset.pattern.permute.xlu0 0
    %204 = vperm.xlu0 %203, %v109
    %v205 = vpop.permute.xlu0 %204
    %208 = vset.pattern.permute.xlu0 0
    %209 = vperm.xlu0 %208, %v111
    %v210 = vpop.permute.xlu0 %209
    %213 = vset.pattern.permute.xlu0 0
    %214 = vperm.xlu0 %213, %v113
    %v215 = vpop.permute.xlu0 %214
    %218 = vset.pattern.permute.xlu0 0
    %219 = vperm.xlu0 %218, %v115
    %v220 = vpop.permute.xlu0 %219
    %223 = vset.pattern.permute.xlu0 0
    %224 = vperm.xlu0 %223, %v117
    %v225 = vpop.permute.xlu0 %224
    %228 = vset.pattern.permute.xlu0 0
    %229 = vperm.xlu0 %228, %v119
    %v230 = vpop.permute.xlu0 %229
    %233 = vset.pattern.permute.xlu0 0
    %234 = vperm.xlu0 %233, %v121
    %v235 = vpop.permute.xlu0 %234
    %238 = vset.pattern.permute.xlu0 0
    %239 = vperm.xlu0 %238, %v123
    %v240 = vpop.permute.xlu0 %239
    %243 = vset.pattern.permute.xlu0 0
    %244 = vperm.xlu0 %243, %v125
    %v245 = vpop.permute.xlu0 %244
    %248 = vset.pattern.permute.xlu0 0
    %249 = vperm.xlu0 %248, %v127
    %v250 = vpop.permute.xlu0 %249
    %253 = vset.pattern.permute.xlu0 0
    %254 = vperm.xlu0 %253, %v129
    %v255 = vpop.permute.xlu0 %254
    %258 = vset.pattern.permute.xlu0 0
    %259 = vperm.xlu0 %258, %v131
    %v260 = vpop.permute.xlu0 %259
    %263 = vset.pattern.permute.xlu0 0
    %264 = vperm.xlu0 %263, %v133
    %v265 = vpop.permute.xlu0 %264
    %268 = vset.pattern.permute.xlu0 0
    %269 = vperm.xlu0 %268, %v135
    %v270 = vpop.permute.xlu0 %269
    %273 = vset.pattern.permute.xlu0 0
    %274 = vperm.xlu0 %273, %v137
    %v275 = vpop.permute.xlu0 %274
    %278 = vset.pattern.permute.xlu0 0
    %279 = vperm.xlu0 %278, %v139
    %v280 = vpop.permute.xlu0 %279
    %283 = vset.pattern.permute.xlu0 0
    %284 = vperm.xlu0 %283, %v141
    %v285 = vpop.permute.xlu0 %284
    %288 = vset.pattern.permute.xlu0 0
    %289 = vperm.xlu0 %288, %v143
    %v290 = vpop.permute.xlu0 %289
    %293 = vset.pattern.permute.xlu0 0
    %294 = vperm.xlu0 %293, %v145
    %v295 = vpop.permute.xlu0 %294
    %298 = vset.pattern.permute.xlu0 0
    %299 = vperm.xlu0 %298, %v147
    %v300 = vpop.permute.xlu0 %299
    %303 = vset.pattern.permute.xlu0 0
    %304 = vperm.xlu0 %303, %v149
    %v305 = vpop.permute.xlu0 %304
    %308 = vset.pattern.permute.xlu0 0
    %309 = vperm.xlu0 %308, %v151
    %v310 = vpop.permute.xlu0 %309
    %313 = vset.pattern.permute.xlu0 0
    %314 = vperm.xlu0 %313, %v153
    %v315 = vpop.permute.xlu0 %314
    %v318 = vlaneseq
    %v319 = vshrl.u32 %v318, 7
    %v320 = vsub.s32 0, %v319
    %v321 = vrot.slane %v156, %v320
    %v322 = vlaneseq
    %v323 = vshrl.u32 %v322, 7
    %v324 = vsub.s32 1, %v323
    %v325 = vrot.slane %v156, %v324
    %v328 = vmul.f32 %v160, %v321
    %v329 = vmul.f32 %v160, %v325
    %v330 = vmul.f32 %v165, %v321
    %v331 = vmul.f32 %v165, %v325
    %v332 = vmul.f32 %v170, %v321
    %v333 = vmul.f32 %v170, %v325
    %v334 = vmul.f32 %v175, %v321
    %v335 = vmul.f32 %v175, %v325
    %v336 = vmul.f32 %v180, %v321
    %v337 = vmul.f32 %v180, %v325
    %v338 = vmul.f32 %v185, %v321
    %v339 = vmul.f32 %v185, %v325
    %v340 = vmul.f32 %v190, %v321
    %v341 = vmul.f32 %v190, %v325
    %v342 = vmul.f32 %v195, %v321
    %v343 = vmul.f32 %v195, %v325
    %v344 = vmul.f32 %v200, %v321
    %v345 = vmul.f32 %v200, %v325
    %v346 = vmul.f32 %v205, %v321
    %v347 = vmul.f32 %v205, %v325
    %v348 = vmul.f32 %v210, %v321
    %v349 = vmul.f32 %v210, %v325
    %v350 = vmul.f32 %v215, %v321
    %v351 = vmul.f32 %v215, %v325
    %v352 = vmul.f32 %v220, %v321
    %v353 = vmul.f32 %v220, %v325
    %v354 = vmul.f32 %v225, %v321
    %v355 = vmul.f32 %v225, %v325
    %v356 = vmul.f32 %v230, %v321
    %v357 = vmul.f32 %v230, %v325
    %v358 = vmul.f32 %v235, %v321
    %v359 = vmul.f32 %v235, %v325
    %v360 = vmul.f32 %v240, %v321
    %v361 = vmul.f32 %v240, %v325
    %v362 = vmul.f32 %v245, %v321
    %v363 = vmul.f32 %v245, %v325
    %v364 = vmul.f32 %v250, %v321
    %v365 = vmul.f32 %v250, %v325
    %v366 = vmul.f32 %v255, %v321
    %v367 = vmul.f32 %v255, %v325
    %v368 = vmul.f32 %v260, %v321
    %v369 = vmul.f32 %v260, %v325
    %v370 = vmul.f32 %v265, %v321
    %v371 = vmul.f32 %v265, %v325
    %v372 = vmul.f32 %v270, %v321
    %v373 = vmul.f32 %v270, %v325
    %v374 = vmul.f32 %v275, %v321
    %v375 = vmul.f32 %v275, %v325
    %v376 = vmul.f32 %v280, %v321
    %v377 = vmul.f32 %v280, %v325
    %v378 = vmul.f32 %v285, %v321
    %v379 = vmul.f32 %v285, %v325
    %v380 = vmul.f32 %v290, %v321
    %v381 = vmul.f32 %v290, %v325
    %v382 = vmul.f32 %v295, %v321
    %v383 = vmul.f32 %v295, %v325
    %v384 = vmul.f32 %v300, %v321
    %v385 = vmul.f32 %v300, %v325
    %v386 = vmul.f32 %v305, %v321
    %v387 = vmul.f32 %v305, %v325
    %v388 = vmul.f32 %v310, %v321
    %v389 = vmul.f32 %v310, %v325
    %v390 = vmul.f32 %v315, %v321
    %v391 = vmul.f32 %v315, %v325
    %393 = vset.pattern.permute.xlu0 0
    %394 = vperm.xlu0 %393, %v24
    %v395 = vpop.permute.xlu0 %394
    %398 = vset.pattern.permute.xlu0 0
    %399 = vperm.xlu0 %398, %v25
    %v400 = vpop.permute.xlu0 %399
    %403 = vset.pattern.permute.xlu0 0
    %404 = vperm.xlu0 %403, %v26
    %v405 = vpop.permute.xlu0 %404
    %408 = vset.pattern.permute.xlu0 0
    %409 = vperm.xlu0 %408, %v27
    %v410 = vpop.permute.xlu0 %409
    %413 = vset.pattern.permute.xlu0 0
    %414 = vperm.xlu0 %413, %v28
    %v415 = vpop.permute.xlu0 %414
    %418 = vset.pattern.permute.xlu0 0
    %419 = vperm.xlu0 %418, %v29
    %v420 = vpop.permute.xlu0 %419
    %423 = vset.pattern.permute.xlu0 0
    %424 = vperm.xlu0 %423, %v30
    %v425 = vpop.permute.xlu0 %424
    %428 = vset.pattern.permute.xlu0 0
    %429 = vperm.xlu0 %428, %v31
    %v430 = vpop.permute.xlu0 %429
    %433 = vset.pattern.permute.xlu0 0
    %434 = vperm.xlu0 %433, %v32
    %v435 = vpop.permute.xlu0 %434
    %438 = vset.pattern.permute.xlu0 0
    %439 = vperm.xlu0 %438, %v33
    %v440 = vpop.permute.xlu0 %439
    %443 = vset.pattern.permute.xlu0 0
    %444 = vperm.xlu0 %443, %v34
    %v445 = vpop.permute.xlu0 %444
    %448 = vset.pattern.permute.xlu0 0
    %449 = vperm.xlu0 %448, %v35
    %v450 = vpop.permute.xlu0 %449
    %453 = vset.pattern.permute.xlu0 0
    %454 = vperm.xlu0 %453, %v36
    %v455 = vpop.permute.xlu0 %454
    %458 = vset.pattern.permute.xlu0 0
    %459 = vperm.xlu0 %458, %v37
    %v460 = vpop.permute.xlu0 %459
    %463 = vset.pattern.permute.xlu0 0
    %464 = vperm.xlu0 %463, %v38
    %v465 = vpop.permute.xlu0 %464
    %468 = vset.pattern.permute.xlu0 0
    %469 = vperm.xlu0 %468, %v39
    %v470 = vpop.permute.xlu0 %469
    %473 = vset.pattern.permute.xlu0 0
    %474 = vperm.xlu0 %473, %v40
    %v475 = vpop.permute.xlu0 %474
    %478 = vset.pattern.permute.xlu0 0
    %479 = vperm.xlu0 %478, %v41
    %v480 = vpop.permute.xlu0 %479
    %483 = vset.pattern.permute.xlu0 0
    %484 = vperm.xlu0 %483, %v42
    %v485 = vpop.permute.xlu0 %484
    %488 = vset.pattern.permute.xlu0 0
    %489 = vperm.xlu0 %488, %v43
    %v490 = vpop.permute.xlu0 %489
    %493 = vset.pattern.permute.xlu0 0
    %494 = vperm.xlu0 %493, %v44
    %v495 = vpop.permute.xlu0 %494
    %498 = vset.pattern.permute.xlu0 0
    %499 = vperm.xlu0 %498, %v45
    %v500 = vpop.permute.xlu0 %499
    %503 = vset.pattern.permute.xlu0 0
    %504 = vperm.xlu0 %503, %v46
    %v505 = vpop.permute.xlu0 %504
    %508 = vset.pattern.permute.xlu0 0
    %509 = vperm.xlu0 %508, %v47
    %v510 = vpop.permute.xlu0 %509
    %513 = vset.pattern.permute.xlu0 0
    %514 = vperm.xlu0 %513, %v48
    %v515 = vpop.permute.xlu0 %514
    %518 = vset.pattern.permute.xlu0 0
    %519 = vperm.xlu0 %518, %v49
    %v520 = vpop.permute.xlu0 %519
    %523 = vset.pattern.permute.xlu0 0
    %524 = vperm.xlu0 %523, %v50
    %v525 = vpop.permute.xlu0 %524
    %528 = vset.pattern.permute.xlu0 0
    %529 = vperm.xlu0 %528, %v51
    %v530 = vpop.permute.xlu0 %529
    %533 = vset.pattern.permute.xlu0 0
    %534 = vperm.xlu0 %533, %v52
    %v535 = vpop.permute.xlu0 %534
    %538 = vset.pattern.permute.xlu0 0
    %539 = vperm.xlu0 %538, %v53
    %v540 = vpop.permute.xlu0 %539
    %543 = vset.pattern.permute.xlu0 0
    %544 = vperm.xlu0 %543, %v54
    %v545 = vpop.permute.xlu0 %544
    %548 = vset.pattern.permute.xlu0 0
    %549 = vperm.xlu0 %548, %v55
    %v550 = vpop.permute.xlu0 %549
    %v553 = vlaneseq
    %v554 = vshrl.u32 %v553, 7
    %v555 = vsub.s32 0, %v554
    %v556 = vrot.slane %v88, %v555
    %v557 = vlaneseq
    %v558 = vshrl.u32 %v557, 7
    %v559 = vsub.s32 1, %v558
    %v560 = vrot.slane %v88, %v559
    %v563 = vsub.f32 %v395, %v556
    %v564 = vsub.f32 %v395, %v560
    %v565 = vsub.f32 %v400, %v556
    %v566 = vsub.f32 %v400, %v560
    %v567 = vsub.f32 %v405, %v556
    %v568 = vsub.f32 %v405, %v560
    %v569 = vsub.f32 %v410, %v556
    %v570 = vsub.f32 %v410, %v560
    %v571 = vsub.f32 %v415, %v556
    %v572 = vsub.f32 %v415, %v560
    %v573 = vsub.f32 %v420, %v556
    %v574 = vsub.f32 %v420, %v560
    %v575 = vsub.f32 %v425, %v556
    %v576 = vsub.f32 %v425, %v560
    %v577 = vsub.f32 %v430, %v556
    %v578 = vsub.f32 %v430, %v560
    %v579 = vsub.f32 %v435, %v556
    %v580 = vsub.f32 %v435, %v560
    %v581 = vsub.f32 %v440, %v556
    %v582 = vsub.f32 %v440, %v560
    %v583 = vsub.f32 %v445, %v556
    %v584 = vsub.f32 %v445, %v560
    %v585 = vsub.f32 %v450, %v556
    %v586 = vsub.f32 %v450, %v560
    %v587 = vsub.f32 %v455, %v556
    %v588 = vsub.f32 %v455, %v560
    %v589 = vsub.f32 %v460, %v556
    %v590 = vsub.f32 %v460, %v560
    %v591 = vsub.f32 %v465, %v556
    %v592 = vsub.f32 %v465, %v560
    %v593 = vsub.f32 %v470, %v556
    %v594 = vsub.f32 %v470, %v560
    %v595 = vsub.f32 %v475, %v556
    %v596 = vsub.f32 %v475, %v560
    %v597 = vsub.f32 %v480, %v556
    %v598 = vsub.f32 %v480, %v560
    %v599 = vsub.f32 %v485, %v556
    %v600 = vsub.f32 %v485, %v560
    %v601 = vsub.f32 %v490, %v556
    %v602 = vsub.f32 %v490, %v560
    %v603 = vsub.f32 %v495, %v556
    %v604 = vsub.f32 %v495, %v560
    %v605 = vsub.f32 %v500, %v556
    %v606 = vsub.f32 %v500, %v560
    %v607 = vsub.f32 %v505, %v556
    %v608 = vsub.f32 %v505, %v560
    %v609 = vsub.f32 %v510, %v556
    %v610 = vsub.f32 %v510, %v560
    %v611 = vsub.f32 %v515, %v556
    %v612 = vsub.f32 %v515, %v560
    %v613 = vsub.f32 %v520, %v556
    %v614 = vsub.f32 %v520, %v560
    %v615 = vsub.f32 %v525, %v556
    %v616 = vsub.f32 %v525, %v560
    %v617 = vsub.f32 %v530, %v556
    %v618 = vsub.f32 %v530, %v560
    %v619 = vsub.f32 %v535, %v556
    %v620 = vsub.f32 %v535, %v560
    %v621 = vsub.f32 %v540, %v556
    %v622 = vsub.f32 %v540, %v560
    %v623 = vsub.f32 %v545, %v556
    %v624 = vsub.f32 %v545, %v560
    %v625 = vsub.f32 %v550, %v556
    %v626 = vsub.f32 %v550, %v560
    %vm627 = vcmp.lt.f32.partialorder %v328, 1e+30
    %vm628 = vcmp.lt.f32.partialorder %v329, 1e+30
    %vm629 = vcmp.lt.f32.partialorder %v330, 1e+30
    %vm630 = vcmp.lt.f32.partialorder %v331, 1e+30
    %vm631 = vcmp.lt.f32.partialorder %v332, 1e+30
    %vm632 = vcmp.lt.f32.partialorder %v333, 1e+30
    %vm633 = vcmp.lt.f32.partialorder %v334, 1e+30
    %vm634 = vcmp.lt.f32.partialorder %v335, 1e+30
    %vm635 = vcmp.lt.f32.partialorder %v336, 1e+30
    %vm636 = vcmp.lt.f32.partialorder %v337, 1e+30
    %vm637 = vcmp.lt.f32.partialorder %v338, 1e+30
    %vm638 = vcmp.lt.f32.partialorder %v339, 1e+30
    %vm639 = vcmp.lt.f32.partialorder %v340, 1e+30
    %vm640 = vcmp.lt.f32.partialorder %v341, 1e+30
    %vm641 = vcmp.lt.f32.partialorder %v342, 1e+30
    %vm642 = vcmp.lt.f32.partialorder %v343, 1e+30
    %vm643 = vcmp.lt.f32.partialorder %v344, 1e+30
    %vm644 = vcmp.lt.f32.partialorder %v345, 1e+30
    %vm645 = vcmp.lt.f32.partialorder %v346, 1e+30
    %vm646 = vcmp.lt.f32.partialorder %v347, 1e+30
    %vm647 = vcmp.lt.f32.partialorder %v348, 1e+30
    %vm648 = vcmp.lt.f32.partialorder %v349, 1e+30
    %vm649 = vcmp.lt.f32.partialorder %v350, 1e+30
    %vm650 = vcmp.lt.f32.partialorder %v351, 1e+30
    %vm651 = vcmp.lt.f32.partialorder %v352, 1e+30
    %vm652 = vcmp.lt.f32.partialorder %v353, 1e+30
    %vm653 = vcmp.lt.f32.partialorder %v354, 1e+30
    %vm654 = vcmp.lt.f32.partialorder %v355, 1e+30
    %vm655 = vcmp.lt.f32.partialorder %v356, 1e+30
    %vm656 = vcmp.lt.f32.partialorder %v357, 1e+30
    %vm657 = vcmp.lt.f32.partialorder %v358, 1e+30
    %vm658 = vcmp.lt.f32.partialorder %v359, 1e+30
    %vm659 = vcmp.lt.f32.partialorder %v360, 1e+30
    %vm660 = vcmp.lt.f32.partialorder %v361, 1e+30
    %vm661 = vcmp.lt.f32.partialorder %v362, 1e+30
    %vm662 = vcmp.lt.f32.partialorder %v363, 1e+30
    %vm663 = vcmp.lt.f32.partialorder %v364, 1e+30
    %vm664 = vcmp.lt.f32.partialorder %v365, 1e+30
    %vm665 = vcmp.lt.f32.partialorder %v366, 1e+30
    %vm666 = vcmp.lt.f32.partialorder %v367, 1e+30
    %vm667 = vcmp.lt.f32.partialorder %v368, 1e+30
    %vm668 = vcmp.lt.f32.partialorder %v369, 1e+30
    %vm669 = vcmp.lt.f32.partialorder %v370, 1e+30
    %vm670 = vcmp.lt.f32.partialorder %v371, 1e+30
    %vm671 = vcmp.lt.f32.partialorder %v372, 1e+30
    %vm672 = vcmp.lt.f32.partialorder %v373, 1e+30
    %vm673 = vcmp.lt.f32.partialorder %v374, 1e+30
    %vm674 = vcmp.lt.f32.partialorder %v375, 1e+30
    %vm675 = vcmp.lt.f32.partialorder %v376, 1e+30
    %vm676 = vcmp.lt.f32.partialorder %v377, 1e+30
    %vm677 = vcmp.lt.f32.partialorder %v378, 1e+30
    %vm678 = vcmp.lt.f32.partialorder %v379, 1e+30
    %vm679 = vcmp.lt.f32.partialorder %v380, 1e+30
    %vm680 = vcmp.lt.f32.partialorder %v381, 1e+30
    %vm681 = vcmp.lt.f32.partialorder %v382, 1e+30
    %vm682 = vcmp.lt.f32.partialorder %v383, 1e+30
    %vm683 = vcmp.lt.f32.partialorder %v384, 1e+30
    %vm684 = vcmp.lt.f32.partialorder %v385, 1e+30
    %vm685 = vcmp.lt.f32.partialorder %v386, 1e+30
    %vm686 = vcmp.lt.f32.partialorder %v387, 1e+30
    %vm687 = vcmp.lt.f32.partialorder %v388, 1e+30
    %vm688 = vcmp.lt.f32.partialorder %v389, 1e+30
    %vm689 = vcmp.lt.f32.partialorder %v390, 1e+30
    %vm690 = vcmp.lt.f32.partialorder %v391, 1e+30
    %v691 = vadd.f32 %v328, 1.0
    %v692 = vadd.f32 %v329, 1.0
    %v693 = vadd.f32 %v330, 1.0
    %v694 = vadd.f32 %v331, 1.0
    %v695 = vadd.f32 %v332, 1.0
    %v696 = vadd.f32 %v333, 1.0
    %v697 = vadd.f32 %v334, 1.0
    %v698 = vadd.f32 %v335, 1.0
    %v699 = vadd.f32 %v336, 1.0
    %v700 = vadd.f32 %v337, 1.0
    %v701 = vadd.f32 %v338, 1.0
    %v702 = vadd.f32 %v339, 1.0
    %v703 = vadd.f32 %v340, 1.0
    %v704 = vadd.f32 %v341, 1.0
    %v705 = vadd.f32 %v342, 1.0
    %v706 = vadd.f32 %v343, 1.0
    %v707 = vadd.f32 %v344, 1.0
    %v708 = vadd.f32 %v345, 1.0
    %v709 = vadd.f32 %v346, 1.0
    %v710 = vadd.f32 %v347, 1.0
    %v711 = vadd.f32 %v348, 1.0
    %v712 = vadd.f32 %v349, 1.0
    %v713 = vadd.f32 %v350, 1.0
    %v714 = vadd.f32 %v351, 1.0
    %v715 = vadd.f32 %v352, 1.0
    %v716 = vadd.f32 %v353, 1.0
    %v717 = vadd.f32 %v354, 1.0
    %v718 = vadd.f32 %v355, 1.0
    %v719 = vadd.f32 %v356, 1.0
    %v720 = vadd.f32 %v357, 1.0
    %v721 = vadd.f32 %v358, 1.0
    %v722 = vadd.f32 %v359, 1.0
    %v723 = vadd.f32 %v360, 1.0
    %v724 = vadd.f32 %v361, 1.0
    %v725 = vadd.f32 %v362, 1.0
    %v726 = vadd.f32 %v363, 1.0
    %v727 = vadd.f32 %v364, 1.0
    %v728 = vadd.f32 %v365, 1.0
    %v729 = vadd.f32 %v366, 1.0
    %v730 = vadd.f32 %v367, 1.0
    %v731 = vadd.f32 %v368, 1.0
    %v732 = vadd.f32 %v369, 1.0
    %v733 = vadd.f32 %v370, 1.0
    %v734 = vadd.f32 %v371, 1.0
    %v735 = vadd.f32 %v372, 1.0
    %v736 = vadd.f32 %v373, 1.0
    %v737 = vadd.f32 %v374, 1.0
    %v738 = vadd.f32 %v375, 1.0
    %v739 = vadd.f32 %v376, 1.0
    %v740 = vadd.f32 %v377, 1.0
    %v741 = vadd.f32 %v378, 1.0
    %v742 = vadd.f32 %v379, 1.0
    %v743 = vadd.f32 %v380, 1.0
    %v744 = vadd.f32 %v381, 1.0
    %v745 = vadd.f32 %v382, 1.0
    %v746 = vadd.f32 %v383, 1.0
    %v747 = vadd.f32 %v384, 1.0
    %v748 = vadd.f32 %v385, 1.0
    %v749 = vadd.f32 %v386, 1.0
    %v750 = vadd.f32 %v387, 1.0
    %v751 = vadd.f32 %v388, 1.0
    %v752 = vadd.f32 %v389, 1.0
    %v753 = vadd.f32 %v390, 1.0
    %v754 = vadd.f32 %v391, 1.0
    %v755 = vlog2.pop %v691
    %v756 = vmul.f32 %v755, 0.6931472
    %v757 = vlog2.pop %v692
    %v758 = vmul.f32 %v757, 0.6931472
    %v759 = vlog2.pop %v693
    %v760 = vmul.f32 %v759, 0.6931472
    %v761 = vlog2.pop %v694
    %v762 = vmul.f32 %v761, 0.6931472
    %v763 = vlog2.pop %v695
    %v764 = vmul.f32 %v763, 0.6931472
    %v765 = vlog2.pop %v696
    %v766 = vmul.f32 %v765, 0.6931472
    %v767 = vlog2.pop %v697
    %v768 = vmul.f32 %v767, 0.6931472
    %v769 = vlog2.pop %v698
    %v770 = vmul.f32 %v769, 0.6931472
    %v771 = vlog2.pop %v699
    %v772 = vmul.f32 %v771, 0.6931472
    %v773 = vlog2.pop %v700
    %v774 = vmul.f32 %v773, 0.6931472
    %v775 = vlog2.pop %v701
    %v776 = vmul.f32 %v775, 0.6931472
    %v777 = vlog2.pop %v702
    %v778 = vmul.f32 %v777, 0.6931472
    %v779 = vlog2.pop %v703
    %v780 = vmul.f32 %v779, 0.6931472
    %v781 = vlog2.pop %v704
    %v782 = vmul.f32 %v781, 0.6931472
    %v783 = vlog2.pop %v705
    %v784 = vmul.f32 %v783, 0.6931472
    %v785 = vlog2.pop %v706
    %v786 = vmul.f32 %v785, 0.6931472
    %v787 = vlog2.pop %v707
    %v788 = vmul.f32 %v787, 0.6931472
    %v789 = vlog2.pop %v708
    %v790 = vmul.f32 %v789, 0.6931472
    %v791 = vlog2.pop %v709
    %v792 = vmul.f32 %v791, 0.6931472
    %v793 = vlog2.pop %v710
    %v794 = vmul.f32 %v793, 0.6931472
    %v795 = vlog2.pop %v711
    %v796 = vmul.f32 %v795, 0.6931472
    %v797 = vlog2.pop %v712
    %v798 = vmul.f32 %v797, 0.6931472
    %v799 = vlog2.pop %v713
    %v800 = vmul.f32 %v799, 0.6931472
    %v801 = vlog2.pop %v714
    %v802 = vmul.f32 %v801, 0.6931472
    %v803 = vlog2.pop %v715
    %v804 = vmul.f32 %v803, 0.6931472
    %v805 = vlog2.pop %v716
    %v806 = vmul.f32 %v805, 0.6931472
    %v807 = vlog2.pop %v717
    %v808 = vmul.f32 %v807, 0.6931472
    %v809 = vlog2.pop %v718
    %v810 = vmul.f32 %v809, 0.6931472
    %v811 = vlog2.pop %v719
    %v812 = vmul.f32 %v811, 0.6931472
    %v813 = vlog2.pop %v720
    %v814 = vmul.f32 %v813, 0.6931472
    %v815 = vlog2.pop %v721
    %v816 = vmul.f32 %v815, 0.6931472
    %v817 = vlog2.pop %v722
    %v818 = vmul.f32 %v817, 0.6931472
    %v819 = vlog2.pop %v723
    %v820 = vmul.f32 %v819, 0.6931472
    %v821 = vlog2.pop %v724
    %v822 = vmul.f32 %v821, 0.6931472
    %v823 = vlog2.pop %v725
    %v824 = vmul.f32 %v823, 0.6931472
    %v825 = vlog2.pop %v726
    %v826 = vmul.f32 %v825, 0.6931472
    %v827 = vlog2.pop %v727
    %v828 = vmul.f32 %v827, 0.6931472
    %v829 = vlog2.pop %v728
    %v830 = vmul.f32 %v829, 0.6931472
    %v831 = vlog2.pop %v729
    %v832 = vmul.f32 %v831, 0.6931472
    %v833 = vlog2.pop %v730
    %v834 = vmul.f32 %v833, 0.6931472
    %v835 = vlog2.pop %v731
    %v836 = vmul.f32 %v835, 0.6931472
    %v837 = vlog2.pop %v732
    %v838 = vmul.f32 %v837, 0.6931472
    %v839 = vlog2.pop %v733
    %v840 = vmul.f32 %v839, 0.6931472
    %v841 = vlog2.pop %v734
    %v842 = vmul.f32 %v841, 0.6931472
    %v843 = vlog2.pop %v735
    %v844 = vmul.f32 %v843, 0.6931472
    %v845 = vlog2.pop %v736
    %v846 = vmul.f32 %v845, 0.6931472
    %v847 = vlog2.pop %v737
    %v848 = vmul.f32 %v847, 0.6931472
    %v849 = vlog2.pop %v738
    %v850 = vmul.f32 %v849, 0.6931472
    %v851 = vlog2.pop %v739
    %v852 = vmul.f32 %v851, 0.6931472
    %v853 = vlog2.pop %v740
    %v854 = vmul.f32 %v853, 0.6931472
    %v855 = vlog2.pop %v741
    %v856 = vmul.f32 %v855, 0.6931472
    %v857 = vlog2.pop %v742
    %v858 = vmul.f32 %v857, 0.6931472
    %v859 = vlog2.pop %v743
    %v860 = vmul.f32 %v859, 0.6931472
    %v861 = vlog2.pop %v744
    %v862 = vmul.f32 %v861, 0.6931472
    %v863 = vlog2.pop %v745
    %v864 = vmul.f32 %v863, 0.6931472
    %v865 = vlog2.pop %v746
    %v866 = vmul.f32 %v865, 0.6931472
    %v867 = vlog2.pop %v747
    %v868 = vmul.f32 %v867, 0.6931472
    %v869 = vlog2.pop %v748
    %v870 = vmul.f32 %v869, 0.6931472
    %v871 = vlog2.pop %v749
    %v872 = vmul.f32 %v871, 0.6931472
    %v873 = vlog2.pop %v750
    %v874 = vmul.f32 %v873, 0.6931472
    %v875 = vlog2.pop %v751
    %v876 = vmul.f32 %v875, 0.6931472
    %v877 = vlog2.pop %v752
    %v878 = vmul.f32 %v877, 0.6931472
    %v879 = vlog2.pop %v753
    %v880 = vmul.f32 %v879, 0.6931472
    %v881 = vlog2.pop %v754
    %v882 = vmul.f32 %v881, 0.6931472
    %v883 = vsel %vm627, %v756, %v563
    %v884 = vsel %vm628, %v758, %v564
    %v885 = vsel %vm629, %v760, %v565
    %v886 = vsel %vm630, %v762, %v566
    %v887 = vsel %vm631, %v764, %v567
    %v888 = vsel %vm632, %v766, %v568
    %v889 = vsel %vm633, %v768, %v569
    %v890 = vsel %vm634, %v770, %v570
    %v891 = vsel %vm635, %v772, %v571
    %v892 = vsel %vm636, %v774, %v572
    %v893 = vsel %vm637, %v776, %v573
    %v894 = vsel %vm638, %v778, %v574
    %v895 = vsel %vm639, %v780, %v575
    %v896 = vsel %vm640, %v782, %v576
    %v897 = vsel %vm641, %v784, %v577
    %v898 = vsel %vm642, %v786, %v578
    %v899 = vsel %vm643, %v788, %v579
    %v900 = vsel %vm644, %v790, %v580
    %v901 = vsel %vm645, %v792, %v581
    %v902 = vsel %vm646, %v794, %v582
    %v903 = vsel %vm647, %v796, %v583
    %v904 = vsel %vm648, %v798, %v584
    %v905 = vsel %vm649, %v800, %v585
    %v906 = vsel %vm650, %v802, %v586
    %v907 = vsel %vm651, %v804, %v587
    %v908 = vsel %vm652, %v806, %v588
    %v909 = vsel %vm653, %v808, %v589
    %v910 = vsel %vm654, %v810, %v590
    %v911 = vsel %vm655, %v812, %v591
    %v912 = vsel %vm656, %v814, %v592
    %v913 = vsel %vm657, %v816, %v593
    %v914 = vsel %vm658, %v818, %v594
    %v915 = vsel %vm659, %v820, %v595
    %v916 = vsel %vm660, %v822, %v596
    %v917 = vsel %vm661, %v824, %v597
    %v918 = vsel %vm662, %v826, %v598
    %v919 = vsel %vm663, %v828, %v599
    %v920 = vsel %vm664, %v830, %v600
    %v921 = vsel %vm665, %v832, %v601
    %v922 = vsel %vm666, %v834, %v602
    %v923 = vsel %vm667, %v836, %v603
    %v924 = vsel %vm668, %v838, %v604
    %v925 = vsel %vm669, %v840, %v605
    %v926 = vsel %vm670, %v842, %v606
    %v927 = vsel %vm671, %v844, %v607
    %v928 = vsel %vm672, %v846, %v608
    %v929 = vsel %vm673, %v848, %v609
    %v930 = vsel %vm674, %v850, %v610
    %v931 = vsel %vm675, %v852, %v611
    %v932 = vsel %vm676, %v854, %v612
    %v933 = vsel %vm677, %v856, %v613
    %v934 = vsel %vm678, %v858, %v614
    %v935 = vsel %vm679, %v860, %v615
    %v936 = vsel %vm680, %v862, %v616
    %v937 = vsel %vm681, %v864, %v617
    %v938 = vsel %vm682, %v866, %v618
    %v939 = vsel %vm683, %v868, %v619
    %v940 = vsel %vm684, %v870, %v620
    %v941 = vsel %vm685, %v872, %v621
    %v942 = vsel %vm686, %v874, %v622
    %v943 = vsel %vm687, %v876, %v623
    %v944 = vsel %vm688, %v878, %v624
    %v945 = vsel %vm689, %v880, %v625
    %v946 = vsel %vm690, %v882, %v626
    %v948 = vlaneseq
    %v949 = vshrl.u32 %v948, 7
    %v950 = vsub.s32 0, %v949
    %v951 = vrot.slane %v89, %v950
    %v952 = vlaneseq
    %v953 = vshrl.u32 %v952, 7
    %v954 = vsub.s32 1, %v953
    %v955 = vrot.slane %v89, %v954
    %959 = vset.pattern.permute.xlu0 0
    %960 = vperm.xlu0 %959, %v56
    %v961 = vpop.permute.xlu0 %960
    %964 = vset.pattern.permute.xlu0 0
    %965 = vperm.xlu0 %964, %v57
    %v966 = vpop.permute.xlu0 %965
    %969 = vset.pattern.permute.xlu0 0
    %970 = vperm.xlu0 %969, %v58
    %v971 = vpop.permute.xlu0 %970
    %974 = vset.pattern.permute.xlu0 0
    %975 = vperm.xlu0 %974, %v59
    %v976 = vpop.permute.xlu0 %975
    %979 = vset.pattern.permute.xlu0 0
    %980 = vperm.xlu0 %979, %v60
    %v981 = vpop.permute.xlu0 %980
    %984 = vset.pattern.permute.xlu0 0
    %985 = vperm.xlu0 %984, %v61
    %v986 = vpop.permute.xlu0 %985
    %989 = vset.pattern.permute.xlu0 0
    %990 = vperm.xlu0 %989, %v62
    %v991 = vpop.permute.xlu0 %990
    %994 = vset.pattern.permute.xlu0 0
    %995 = vperm.xlu0 %994, %v63
    %v996 = vpop.permute.xlu0 %995
    %999 = vset.pattern.permute.xlu0 0
    %1000 = vperm.xlu0 %999, %v64
    %v1001 = vpop.permute.xlu0 %1000
    %1004 = vset.pattern.permute.xlu0 0
    %1005 = vperm.xlu0 %1004, %v65
    %v1006 = vpop.permute.xlu0 %1005
    %1009 = vset.pattern.permute.xlu0 0
    %1010 = vperm.xlu0 %1009, %v66
    %v1011 = vpop.permute.xlu0 %1010
    %1014 = vset.pattern.permute.xlu0 0
    %1015 = vperm.xlu0 %1014, %v67
    %v1016 = vpop.permute.xlu0 %1015
    %1019 = vset.pattern.permute.xlu0 0
    %1020 = vperm.xlu0 %1019, %v68
    %v1021 = vpop.permute.xlu0 %1020
    %1024 = vset.pattern.permute.xlu0 0
    %1025 = vperm.xlu0 %1024, %v69
    %v1026 = vpop.permute.xlu0 %1025
    %1029 = vset.pattern.permute.xlu0 0
    %1030 = vperm.xlu0 %1029, %v70
    %v1031 = vpop.permute.xlu0 %1030
    %1034 = vset.pattern.permute.xlu0 0
    %1035 = vperm.xlu0 %1034, %v71
    %v1036 = vpop.permute.xlu0 %1035
    %1039 = vset.pattern.permute.xlu0 0
    %1040 = vperm.xlu0 %1039, %v72
    %v1041 = vpop.permute.xlu0 %1040
    %1044 = vset.pattern.permute.xlu0 0
    %1045 = vperm.xlu0 %1044, %v73
    %v1046 = vpop.permute.xlu0 %1045
    %1049 = vset.pattern.permute.xlu0 0
    %1050 = vperm.xlu0 %1049, %v74
    %v1051 = vpop.permute.xlu0 %1050
    %1054 = vset.pattern.permute.xlu0 0
    %1055 = vperm.xlu0 %1054, %v75
    %v1056 = vpop.permute.xlu0 %1055
    %1059 = vset.pattern.permute.xlu0 0
    %1060 = vperm.xlu0 %1059, %v76
    %v1061 = vpop.permute.xlu0 %1060
    %1064 = vset.pattern.permute.xlu0 0
    %1065 = vperm.xlu0 %1064, %v77
    %v1066 = vpop.permute.xlu0 %1065
    %1069 = vset.pattern.permute.xlu0 0
    %1070 = vperm.xlu0 %1069, %v78
    %v1071 = vpop.permute.xlu0 %1070
    %1074 = vset.pattern.permute.xlu0 0
    %1075 = vperm.xlu0 %1074, %v79
    %v1076 = vpop.permute.xlu0 %1075
    %1079 = vset.pattern.permute.xlu0 0
    %1080 = vperm.xlu0 %1079, %v80
    %v1081 = vpop.permute.xlu0 %1080
    %1084 = vset.pattern.permute.xlu0 0
    %1085 = vperm.xlu0 %1084, %v81
    %v1086 = vpop.permute.xlu0 %1085
    %1089 = vset.pattern.permute.xlu0 0
    %1090 = vperm.xlu0 %1089, %v82
    %v1091 = vpop.permute.xlu0 %1090
    %1094 = vset.pattern.permute.xlu0 0
    %1095 = vperm.xlu0 %1094, %v83
    %v1096 = vpop.permute.xlu0 %1095
    %1099 = vset.pattern.permute.xlu0 0
    %1100 = vperm.xlu0 %1099, %v84
    %v1101 = vpop.permute.xlu0 %1100
    %1104 = vset.pattern.permute.xlu0 0
    %1105 = vperm.xlu0 %1104, %v85
    %v1106 = vpop.permute.xlu0 %1105
    %1109 = vset.pattern.permute.xlu0 0
    %1110 = vperm.xlu0 %1109, %v86
    %v1111 = vpop.permute.xlu0 %1110
    %1114 = vset.pattern.permute.xlu0 0
    %1115 = vperm.xlu0 %1114, %v87
    %v1116 = vpop.permute.xlu0 %1115
    %vm1118 = vcmp.gt.f32.partialorder %v951, %v961
    %vm1119 = vcmp.gt.f32.partialorder %v955, %v961
    %vm1120 = vcmp.gt.f32.partialorder %v951, %v966
    %vm1121 = vcmp.gt.f32.partialorder %v955, %v966
    %vm1122 = vcmp.gt.f32.partialorder %v951, %v971
    %vm1123 = vcmp.gt.f32.partialorder %v955, %v971
    %vm1124 = vcmp.gt.f32.partialorder %v951, %v976
    %vm1125 = vcmp.gt.f32.partialorder %v955, %v976
    %vm1126 = vcmp.gt.f32.partialorder %v951, %v981
    %vm1127 = vcmp.gt.f32.partialorder %v955, %v981
    %vm1128 = vcmp.gt.f32.partialorder %v951, %v986
    %vm1129 = vcmp.gt.f32.partialorder %v955, %v986
    %vm1130 = vcmp.gt.f32.partialorder %v951, %v991
    %vm1131 = vcmp.gt.f32.partialorder %v955, %v991
    %vm1132 = vcmp.gt.f32.partialorder %v951, %v996
    %vm1133 = vcmp.gt.f32.partialorder %v955, %v996
    %vm1134 = vcmp.gt.f32.partialorder %v951, %v1001
    %vm1135 = vcmp.gt.f32.partialorder %v955, %v1001
    %vm1136 = vcmp.gt.f32.partialorder %v951, %v1006
    %vm1137 = vcmp.gt.f32.partialorder %v955, %v1006
    %vm1138 = vcmp.gt.f32.partialorder %v951, %v1011
    %vm1139 = vcmp.gt.f32.partialorder %v955, %v1011
    %vm1140 = vcmp.gt.f32.partialorder %v951, %v1016
    %vm1141 = vcmp.gt.f32.partialorder %v955, %v1016
    %vm1142 = vcmp.gt.f32.partialorder %v951, %v1021
    %vm1143 = vcmp.gt.f32.partialorder %v955, %v1021
    %vm1144 = vcmp.gt.f32.partialorder %v951, %v1026
    %vm1145 = vcmp.gt.f32.partialorder %v955, %v1026
    %vm1146 = vcmp.gt.f32.partialorder %v951, %v1031
    %vm1147 = vcmp.gt.f32.partialorder %v955, %v1031
    %vm1148 = vcmp.gt.f32.partialorder %v951, %v1036
    %vm1149 = vcmp.gt.f32.partialorder %v955, %v1036
    %vm1150 = vcmp.gt.f32.partialorder %v951, %v1041
    %vm1151 = vcmp.gt.f32.partialorder %v955, %v1041
    %vm1152 = vcmp.gt.f32.partialorder %v951, %v1046
    %vm1153 = vcmp.gt.f32.partialorder %v955, %v1046
    %vm1154 = vcmp.gt.f32.partialorder %v951, %v1051
    %vm1155 = vcmp.gt.f32.partialorder %v955, %v1051
    %vm1156 = vcmp.gt.f32.partialorder %v951, %v1056
    %vm1157 = vcmp.gt.f32.partialorder %v955, %v1056
    %vm1158 = vcmp.gt.f32.partialorder %v951, %v1061
    %vm1159 = vcmp.gt.f32.partialorder %v955, %v1061
    %vm1160 = vcmp.gt.f32.partialorder %v951, %v1066
    %vm1161 = vcmp.gt.f32.partialorder %v955, %v1066
    %vm1162 = vcmp.gt.f32.partialorder %v951, %v1071
    %vm1163 = vcmp.gt.f32.partialorder %v955, %v1071
    %vm1164 = vcmp.gt.f32.partialorder %v951, %v1076
    %vm1165 = vcmp.gt.f32.partialorder %v955, %v1076
    %vm1166 = vcmp.gt.f32.partialorder %v951, %v1081
    %vm1167 = vcmp.gt.f32.partialorder %v955, %v1081
    %vm1168 = vcmp.gt.f32.partialorder %v951, %v1086
    %vm1169 = vcmp.gt.f32.partialorder %v955, %v1086
    %vm1170 = vcmp.gt.f32.partialorder %v951, %v1091
    %vm1171 = vcmp.gt.f32.partialorder %v955, %v1091
    %vm1172 = vcmp.gt.f32.partialorder %v951, %v1096
    %vm1173 = vcmp.gt.f32.partialorder %v955, %v1096
    %vm1174 = vcmp.gt.f32.partialorder %v951, %v1101
    %vm1175 = vcmp.gt.f32.partialorder %v955, %v1101
    %vm1176 = vcmp.gt.f32.partialorder %v951, %v1106
    %vm1177 = vcmp.gt.f32.partialorder %v955, %v1106
    %vm1178 = vcmp.gt.f32.partialorder %v951, %v1111
    %vm1179 = vcmp.gt.f32.partialorder %v955, %v1111
    %vm1180 = vcmp.gt.f32.partialorder %v951, %v1116
    %vm1181 = vcmp.gt.f32.partialorder %v955, %v1116
    %v1182 = vsel %vm1118, %v883, 0.0
    %v1183 = vsel %vm1119, %v884, 0.0
    %v1184 = vsel %vm1120, %v885, 0.0
    %v1185 = vsel %vm1121, %v886, 0.0
    %v1186 = vsel %vm1122, %v887, 0.0
    %v1187 = vsel %vm1123, %v888, 0.0
    %v1188 = vsel %vm1124, %v889, 0.0
    %v1189 = vsel %vm1125, %v890, 0.0
    %v1190 = vsel %vm1126, %v891, 0.0
    %v1191 = vsel %vm1127, %v892, 0.0
    %v1192 = vsel %vm1128, %v893, 0.0
    %v1193 = vsel %vm1129, %v894, 0.0
    %v1194 = vsel %vm1130, %v895, 0.0
    %v1195 = vsel %vm1131, %v896, 0.0
    %v1196 = vsel %vm1132, %v897, 0.0
    %v1197 = vsel %vm1133, %v898, 0.0
    %v1198 = vsel %vm1134, %v899, 0.0
    %v1199 = vsel %vm1135, %v900, 0.0
    %v1200 = vsel %vm1136, %v901, 0.0
    %v1201 = vsel %vm1137, %v902, 0.0
    %v1202 = vsel %vm1138, %v903, 0.0
    %v1203 = vsel %vm1139, %v904, 0.0
    %v1204 = vsel %vm1140, %v905, 0.0
    %v1205 = vsel %vm1141, %v906, 0.0
    %v1206 = vsel %vm1142, %v907, 0.0
    %v1207 = vsel %vm1143, %v908, 0.0
    %v1208 = vsel %vm1144, %v909, 0.0
    %v1209 = vsel %vm1145, %v910, 0.0
    %v1210 = vsel %vm1146, %v911, 0.0
    %v1211 = vsel %vm1147, %v912, 0.0
    %v1212 = vsel %vm1148, %v913, 0.0
    %v1213 = vsel %vm1149, %v914, 0.0
    %v1214 = vsel %vm1150, %v915, 0.0
    %v1215 = vsel %vm1151, %v916, 0.0
    %v1216 = vsel %vm1152, %v917, 0.0
    %v1217 = vsel %vm1153, %v918, 0.0
    %v1218 = vsel %vm1154, %v919, 0.0
    %v1219 = vsel %vm1155, %v920, 0.0
    %v1220 = vsel %vm1156, %v921, 0.0
    %v1221 = vsel %vm1157, %v922, 0.0
    %v1222 = vsel %vm1158, %v923, 0.0
    %v1223 = vsel %vm1159, %v924, 0.0
    %v1224 = vsel %vm1160, %v925, 0.0
    %v1225 = vsel %vm1161, %v926, 0.0
    %v1226 = vsel %vm1162, %v927, 0.0
    %v1227 = vsel %vm1163, %v928, 0.0
    %v1228 = vsel %vm1164, %v929, 0.0
    %v1229 = vsel %vm1165, %v930, 0.0
    %v1230 = vsel %vm1166, %v931, 0.0
    %v1231 = vsel %vm1167, %v932, 0.0
    %v1232 = vsel %vm1168, %v933, 0.0
    %v1233 = vsel %vm1169, %v934, 0.0
    %v1234 = vsel %vm1170, %v935, 0.0
    %v1235 = vsel %vm1171, %v936, 0.0
    %v1236 = vsel %vm1172, %v937, 0.0
    %v1237 = vsel %vm1173, %v938, 0.0
    %v1238 = vsel %vm1174, %v939, 0.0
    %v1239 = vsel %vm1175, %v940, 0.0
    %v1240 = vsel %vm1176, %v941, 0.0
    %v1241 = vsel %vm1177, %v942, 0.0
    %v1242 = vsel %vm1178, %v943, 0.0
    %v1243 = vsel %vm1179, %v944, 0.0
    %v1244 = vsel %vm1180, %v945, 0.0
    %v1245 = vsel %vm1181, %v946, 0.0
    %v1246 = vadd.f32 %v1182, %v1184
    %v1247 = vadd.f32 %v1183, %v1185
    %v1248 = vadd.f32 %v1246, %v1186
    %v1249 = vadd.f32 %v1247, %v1187
    %v1250 = vadd.f32 %v1248, %v1188
    %v1251 = vadd.f32 %v1249, %v1189
    %v1252 = vadd.f32 %v1250, %v1190
    %v1253 = vadd.f32 %v1251, %v1191
    %v1254 = vadd.f32 %v1252, %v1192
    %v1255 = vadd.f32 %v1253, %v1193
    %v1256 = vadd.f32 %v1254, %v1194
    %v1257 = vadd.f32 %v1255, %v1195
    %v1258 = vadd.f32 %v1256, %v1196
    %v1259 = vadd.f32 %v1257, %v1197
    %v1260 = vadd.f32 %v1258, %v1198
    %v1261 = vadd.f32 %v1259, %v1199
    %v1262 = vadd.f32 %v1260, %v1200
    %v1263 = vadd.f32 %v1261, %v1201
    %v1264 = vadd.f32 %v1262, %v1202
    %v1265 = vadd.f32 %v1263, %v1203
    %v1266 = vadd.f32 %v1264, %v1204
    %v1267 = vadd.f32 %v1265, %v1205
    %v1268 = vadd.f32 %v1266, %v1206
    %v1269 = vadd.f32 %v1267, %v1207
    %v1270 = vadd.f32 %v1268, %v1208
    %v1271 = vadd.f32 %v1269, %v1209
    %v1272 = vadd.f32 %v1270, %v1210
    %v1273 = vadd.f32 %v1271, %v1211
    %v1274 = vadd.f32 %v1272, %v1212
    %v1275 = vadd.f32 %v1273, %v1213
    %v1276 = vadd.f32 %v1274, %v1214
    %v1277 = vadd.f32 %v1275, %v1215
    %v1278 = vadd.f32 %v1276, %v1216
    %v1279 = vadd.f32 %v1277, %v1217
    %v1280 = vadd.f32 %v1278, %v1218
    %v1281 = vadd.f32 %v1279, %v1219
    %v1282 = vadd.f32 %v1280, %v1220
    %v1283 = vadd.f32 %v1281, %v1221
    %v1284 = vadd.f32 %v1282, %v1222
    %v1285 = vadd.f32 %v1283, %v1223
    %v1286 = vadd.f32 %v1284, %v1224
    %v1287 = vadd.f32 %v1285, %v1225
    %v1288 = vadd.f32 %v1286, %v1226
    %v1289 = vadd.f32 %v1287, %v1227
    %v1290 = vadd.f32 %v1288, %v1228
    %v1291 = vadd.f32 %v1289, %v1229
    %v1292 = vadd.f32 %v1290, %v1230
    %v1293 = vadd.f32 %v1291, %v1231
    %v1294 = vadd.f32 %v1292, %v1232
    %v1295 = vadd.f32 %v1293, %v1233
    %v1296 = vadd.f32 %v1294, %v1234
    %v1297 = vadd.f32 %v1295, %v1235
    %v1298 = vadd.f32 %v1296, %v1236
    %v1299 = vadd.f32 %v1297, %v1237
    %v1300 = vadd.f32 %v1298, %v1238
    %v1301 = vadd.f32 %v1299, %v1239
    %v1302 = vadd.f32 %v1300, %v1240
    %v1303 = vadd.f32 %v1301, %v1241
    %v1304 = vadd.f32 %v1302, %v1242
    %v1305 = vadd.f32 %v1303, %v1243
    %v1306 = vadd.f32 %v1304, %v1244
    %v1307 = vadd.f32 %v1305, %v1245
    %v1308 = vld [vmem:[#allocation2] sm:$0xff]
    %v1309 = vld [vmem:[#allocation2 + $0x8] sm:$0xff]
    %v1310 = vadd.f32 %v1308, %v1306
    %v1311 = vadd.f32 %v1309, %v1307
    %1312 = vst [vmem:[#allocation2] sm:$0xff] %v1310
    %1313 = vst [vmem:[#allocation2 + $0x8] sm:$0xff] %v1311
    // Predicated region
    $region22: #{tpu_custom_call.1} parent=1 // pred_check
      _
    $region23: #{tpu_custom_call.1} parent=1 // pred_check_branch
      %1315 = sbr.rel (0) target = $region25
    $region24: #{tpu_custom_call.1} parent=1 // pred_region
      %s1317 = ssub.s32 256, 256
      %1318 = vsyncadd [#allocation3], %s1317
      %s1320 = sshll.u32 [#allocation2], 4
      %s1321 = int_to_ptr.vmem [resolvable:$true] %s1320
      %1323 = dma.vmem_to_hbm [thread:$0]  %s1321, 256, %s4, [#allocation3]
    $region25: #{tpu_custom_call.1} parent=1 // pred_fallthru
      _
    // Predicated region
    $region26: #{tpu_custom_call.1} parent=1 // pred_check
      _
    $region27: #{tpu_custom_call.1} parent=1 // pred_check_branch
      %1325 = sbr.rel (0) target = $region29
    $region28: #{tpu_custom_call.1} parent=1 // pred_region
      %1326 = dma.done [#allocation3], 256
    $region29: #{tpu_custom_call.1} parent=1 // pred_fallthru
      _
    %1327 = vsyncpa [#allocation3], 1

</llo_original>
